<compile_context>
chip_gen: v7x
topology: tpu7x:2x2x1
jax: 0.10.0
libtpu: 0.0.40
codegen_flags: <defaults>
</compile_context>

<pallas_src>
import jax
import jax.numpy as jnp
from jax.experimental import pallas as pl

FEATURE_DIM = 32   # CFG.feature_dim
HIDDEN_DIM = 64    # CFG.hidden_dim


def _make_kernel(gh, h):
    """Fused kernel for static (G*H, H)."""

    def kernel(x_ref, a_ref, w1_ref, w2i_ref, wi2_ref, bias_ref, out_ref):
        x = x_ref[...]                                   # (N, F)
        a = a_ref[...]                                   # (N, N) normalized adjacency

        # Static slices of the packed bias slab (1, GH + 6H).
        b1 = bias_ref[:, 0:gh]                           # (1, GH)  fused conv1 bias
        bpre = bias_ref[:, gh:gh + 3 * h]                # (1, 3H)  folded pre-activation bias
        bi2 = bias_ref[:, gh + 3 * h:gh + 4 * h]         # (1, H)
        gamma = bias_ref[:, gh + 4 * h:gh + 5 * h]       # (1, H)
        beta = bias_ref[:, gh + 5 * h:gh + 6 * h]        # (1, H)

        # Fused GCNConv #1 for all genes, aggregate-then-expand:
        #   h1 = relu((A @ x) @ W1f + b1f)  -> (N, G*H)
        ax = jnp.dot(a, x, preferred_element_type=jnp.float32)              # (N, F)
        h1 = jnp.maximum(
            jnp.dot(ax, w1_ref[...], preferred_element_type=jnp.float32) + b1, 0.0)

        # Folded conv2 + node-mean-pool + gene-mean + integrator linear-1:
        #   p = (1/N) 1^T A  (column mean of A);  q = p @ h1;  pre = q @ W2I + bias_pre
        p = jnp.mean(a, axis=0, keepdims=True)                               # (1, N)
        q = jnp.dot(p, h1, preferred_element_type=jnp.float32)               # (1, G*H)
        pre = jnp.dot(q, w2i_ref[...], preferred_element_type=jnp.float32) + bpre  # (1, 3H)

        # Integrator: ReLU (Dropout = eval no-op) -> linear 2 -> LayerNorm
        hid = jnp.maximum(pre, 0.0)
        o = jnp.dot(hid, wi2_ref[...], preferred_element_type=jnp.float32) + bi2   # (1, H)

        mu = jnp.mean(o, axis=-1, keepdims=True)
        var = jnp.mean((o - mu) ** 2, axis=-1, keepdims=True)
        integrated = (o - mu) * jax.lax.rsqrt(var + 1e-5) * gamma + beta            # (1, H)

        # affinity = sigmoid(integrated.mean())
        affinity = jax.nn.sigmoid(jnp.mean(integrated, axis=-1, keepdims=True))      # (1, 1)

        # Single lane-dense (1, 2H) = (1, 128) store: [integrated | broadcast(affinity)]
        out_ref[...] = jnp.concatenate(
            [integrated, jnp.broadcast_to(affinity, integrated.shape)], axis=-1)

    return kernel


def prepare_fused_params(params):
    """One-time host-side weight fusion (call once, outside the per-inference path)."""
    G, F, H = params["w1"].shape
    GH = G * H

    # Conv1 weights concatenated along output lanes -> (F, G*H); bias likewise.
    w1f = params["w1"].transpose(1, 0, 2).reshape(F, GH)
    b1f = params["b1"].transpose(1, 0, 2).reshape(1, GH)

    # Fold the duplicated-concat integrator weight: cat([c,c]) @ Wi1 == c @ (Wi1[:H]+Wi1[H:])
    wi1f = params["wi1"][:H, :] + params["wi1"][H:, :]                      # (H, 3H)

    # Fold conv2 + node-mean-pool + gene-mean into a single (G*H, 3H) weight.
    w2i = jnp.concatenate(
        [(params["w2"][g] @ wi1f) / G for g in range(G)], axis=0)           # (G*H, 3H)

    # Fold (b2 + cargo) through the pools and Wi1f into one pre-activation bias.
    bias_pre = (jnp.mean(params["b2"] + params["cargo"], axis=0) @ wi1f
                + params["bi1"])                                            # (1, 3H)

    # Pack all 1-row operands into one lane-dense slab: [b1f | bias_pre | bi2 | gamma | beta]
    bias_slab = jnp.concatenate(
        [b1f, bias_pre, params["bi2"], params["gamma"], params["beta"]], axis=-1)  # (1, GH+6H)

    return {
        "w1f": w1f,                      # (F, G*H)
        "w2i": w2i,                      # (G*H, 3H)
        "wi2": params["wi2"],            # (3H, H)
        "bias_slab": bias_slab,          # (1, G*H + 6H)
    }


@jax.jit
def symbiotic_bcell_forward(x, a_norm, w1f, w2i, wi2, bias_slab):
    H = wi2.shape[-1]
    GH = w1f.shape[-1]

    # No grid: single invocation, whole (tiny) arrays resident in VMEM, no pipelining.
    slab = pl.pallas_call(
        _make_kernel(GH, H),
        out_shape=jax.ShapeDtypeStruct((1, 2 * H), jnp.float32),
    )(x, a_norm, w1f, w2i, wi2, bias_slab)

    integrated = slab[:, :H]                                      # (1, H)
    affinity = slab[:, H:H + 1]                                   # (1, 1)
    return affinity, integrated


def build_normalized_adjacency(edge_index, n):
    """Dense D^-1/2 (A + I) D^-1/2 (graph treated as undirected, edges deduped)."""
    src, dst = edge_index[0], edge_index[1]
    a = jnp.zeros((n, n), jnp.float32)
    a = a.at[dst, src].set(1.0)
    a = a.at[src, dst].set(1.0)
    a = jnp.minimum(a + jnp.eye(n, dtype=jnp.float32), 1.0)  # self-loops
    deg = a.sum(axis=1)
    dinv = jax.lax.rsqrt(deg)
    return a * dinv[:, None] * dinv[None, :]


def _reference_forward(x, a_norm, params):
    """Pure-JAX reference with the original (unfused) torch semantics."""
    G = params["w1"].shape[0]
    outs = []
    for g in range(G):
        h = jnp.maximum(a_norm @ (x @ params["w1"][g]) + params["b1"][g], 0.0)
        h = a_norm @ (h @ params["w2"][g]) + params["b2"][g] + params["cargo"][g]
        outs.append(jnp.mean(h, axis=0, keepdims=True))
    combined = jnp.mean(jnp.concatenate(outs, axis=0), axis=0, keepdims=True)
    pre = jnp.concatenate([combined, combined], axis=-1) @ params["wi1"] + params["bi1"]
    hid = jnp.maximum(pre, 0.0)
    o = hid @ params["wi2"] + params["bi2"]
    mu = jnp.mean(o, axis=-1, keepdims=True)
    var = jnp.mean((o - mu) ** 2, axis=-1, keepdims=True)
    integrated = (o - mu) * jax.lax.rsqrt(var + 1e-5) * params["gamma"] + params["beta"]
    affinity = jax.nn.sigmoid(jnp.mean(integrated)).reshape(1, 1)
    return affinity, integrated


if __name__ == "__main__":
    key = jax.random.PRNGKey(0)
    keys = jax.random.split(key, 12)

    N, E = 16, 40
    F, H = FEATURE_DIM, HIDDEN_DIM
    G = 2  # gene 0: Mariner (standard), gene 1: Tn10 (carries cargo)

    x = jax.random.normal(keys[0], (N, F), jnp.float32)
    edge_index = jax.random.randint(keys[1], (2, E), 0, N)
    a_norm = build_normalized_adjacency(edge_index, N)

    params = {
        "w1": 0.1 * jax.random.normal(keys[2], (G, F, H), jnp.float32),
        "b1": 0.1 * jax.random.normal(keys[3], (G, 1, H), jnp.float32),
        "w2": 0.1 * jax.random.normal(keys[4], (G, H, H), jnp.float32),
        "b2": 0.1 * jax.random.normal(keys[5], (G, 1, H), jnp.float32),
        "cargo": jnp.concatenate(
            [jnp.zeros((1, 1, H), jnp.float32),                       # Mariner: none
             jax.random.normal(keys[6], (1, 1, H), jnp.float32)],     # Tn10 cargo
            axis=0),
        "wi1": 0.1 * jax.random.normal(keys[7], (2 * H, 3 * H), jnp.float32),
        "bi1": 0.1 * jax.random.normal(keys[8], (1, 3 * H), jnp.float32),
        "wi2": 0.1 * jax.random.normal(keys[9], (3 * H, H), jnp.float32),
        "bi2": 0.1 * jax.random.normal(keys[10], (1, H), jnp.float32),
        "gamma": jnp.ones((1, H), jnp.float32),   # torch LayerNorm default init
        "beta": jnp.zeros((1, H), jnp.float32),
    }

    # One-time parameter preprocessing (hoisted out of the per-call jitted path).
    fused = prepare_fused_params(params)
    fused = jax.tree_util.tree_map(jax.block_until_ready, fused)

    affinity, integrated = symbiotic_bcell_forward(
        x, a_norm, fused["w1f"], fused["w2i"], fused["wi2"], fused["bias_slab"])
    jax.block_until_ready((affinity, integrated))
    assert affinity.shape == (1, 1) and integrated.shape == (1, H)

    # Correctness check against the unfused pure-JAX reference (f32; loose tolerance
    # only accounts for summation-order changes introduced by the weight folds).
    ref_aff, ref_int = _reference_forward(x, a_norm, params)
    assert jnp.allclose(integrated, ref_int, rtol=1e-3, atol=1e-4), "integrated mismatch"
    assert jnp.allclose(affinity, ref_aff, rtol=1e-3, atol=1e-4), "affinity mismatch"

    print("KERNEL_OK")
</pallas_src>

<mosaic_0001>
module attributes {stable_mosaic.version = 11 : i64} {
  func.func @kernel(%arg0: memref<16x32xf32, #tpu.memory_space<vmem>>, %arg1: memref<16x16xf32, #tpu.memory_space<vmem>>, %arg2: memref<32x128xf32, #tpu.memory_space<vmem>>, %arg3: memref<128x192xf32, #tpu.memory_space<vmem>>, %arg4: memref<192x64xf32, #tpu.memory_space<vmem>>, %arg5: memref<1x512xf32, #tpu.memory_space<vmem>>, %arg6: memref<1x128xf32, #tpu.memory_space<vmem>>) attributes {dimension_semantics = [], scalar_prefetch = 0 : i64, scratch_operands = 0 : i64, tpu.core_type = #tpu.core_type<tc>} {
    %c0 = arith.constant 0 : index
    %c0_0 = arith.constant 0 : index
    %0 = vector.load %arg0[%c0, %c0_0] : memref<16x32xf32, #tpu.memory_space<vmem>>, vector<16x32xf32>
    %c0_1 = arith.constant 0 : index
    %c0_2 = arith.constant 0 : index
    %1 = vector.load %arg1[%c0_1, %c0_2] : memref<16x16xf32, #tpu.memory_space<vmem>>, vector<16x16xf32>
    %c0_3 = arith.constant 0 : index
    %c0_4 = arith.constant 0 : index
    %2 = vector.load %arg5[%c0_3, %c0_4] : memref<1x512xf32, #tpu.memory_space<vmem>>, vector<1x128xf32>
    %c0_5 = arith.constant 0 : index
    %c128 = arith.constant 128 : index
    %3 = vector.load %arg5[%c0_5, %c128] : memref<1x512xf32, #tpu.memory_space<vmem>>, vector<1x192xf32>
    %c0_6 = arith.constant 0 : index
    %c320 = arith.constant 320 : index
    %4 = vector.load %arg5[%c0_6, %c320] : memref<1x512xf32, #tpu.memory_space<vmem>>, vector<1x64xf32>
    %c0_7 = arith.constant 0 : index
    %c384 = arith.constant 384 : index
    %5 = vector.load %arg5[%c0_7, %c384] : memref<1x512xf32, #tpu.memory_space<vmem>>, vector<1x64xf32>
    %c0_8 = arith.constant 0 : index
    %c448 = arith.constant 448 : index
    %6 = vector.load %arg5[%c0_8, %c448] : memref<1x512xf32, #tpu.memory_space<vmem>>, vector<1x64xf32>
    %cst = arith.constant dense<0.000000e+00> : vector<16x32xf32>
    %7 = tpu.matmul %1, %0, %cst {dimension_numbers = #tpu.dot_dimension_numbers<[1], [0], [0], [1], [0, 0, 1, 1], [], []>} : vector<16x16xf32>, vector<16x32xf32>, vector<16x32xf32> -> vector<16x32xf32>
    %c0_9 = arith.constant 0 : index
    %c0_10 = arith.constant 0 : index
    %8 = vector.load %arg2[%c0_9, %c0_10] : memref<32x128xf32, #tpu.memory_space<vmem>>, vector<32x128xf32>
    %cst_11 = arith.constant dense<0.000000e+00> : vector<16x128xf32>
    %9 = tpu.matmul %7, %8, %cst_11 {dimension_numbers = #tpu.dot_dimension_numbers<[1], [0], [0], [1], [0, 0, 1, 1], [], []>} : vector<16x32xf32>, vector<32x128xf32>, vector<16x128xf32> -> vector<16x128xf32>
    %10 = vector.broadcast %2 : vector<1x128xf32> to vector<16x128xf32>
    %11 = arith.addf %9, %10 : vector<16x128xf32>
    %cst_12 = arith.constant 0.000000e+00 : f32
    %12 = vector.broadcast %cst_12 : f32 to vector<16x128xf32>
    %13 = arith.maximumf %11, %12 : vector<16x128xf32>
    %cst_13 = arith.constant dense<0.000000e+00> : vector<16xf32>
    %14 = vector.multi_reduction <add>, %1, %cst_13 [0] : vector<16x16xf32> to vector<16xf32>
    %15 = vector.shape_cast %14 : vector<16xf32> to vector<1x16xf32>
    %cst_14 = arith.constant 1.600000e+01 : f32
    %16 = vector.broadcast %cst_14 : f32 to vector<1x16xf32>
    %17 = arith.divf %15, %16 : vector<1x16xf32>
    %cst_15 = arith.constant dense<0.000000e+00> : vector<1x128xf32>
    %18 = tpu.matmul %17, %13, %cst_15 {dimension_numbers = #tpu.dot_dimension_numbers<[1], [0], [0], [1], [0, 0, 1, 1], [], []>} : vector<1x16xf32>, vector<16x128xf32>, vector<1x128xf32> -> vector<1x128xf32>
    %c0_16 = arith.constant 0 : index
    %c0_17 = arith.constant 0 : index
    %19 = vector.load %arg3[%c0_16, %c0_17] : memref<128x192xf32, #tpu.memory_space<vmem>>, vector<128x192xf32>
    %cst_18 = arith.constant dense<0.000000e+00> : vector<1x192xf32>
    %20 = tpu.matmul %18, %19, %cst_18 {dimension_numbers = #tpu.dot_dimension_numbers<[1], [0], [0], [1], [0, 0, 1, 1], [], []>} : vector<1x128xf32>, vector<128x192xf32>, vector<1x192xf32> -> vector<1x192xf32>
    %21 = arith.addf %20, %3 : vector<1x192xf32>
    %cst_19 = arith.constant 0.000000e+00 : f32
    %22 = vector.broadcast %cst_19 : f32 to vector<1x192xf32>
    %23 = arith.maximumf %21, %22 : vector<1x192xf32>
    %c0_20 = arith.constant 0 : index
    %c0_21 = arith.constant 0 : index
    %24 = vector.load %arg4[%c0_20, %c0_21] : memref<192x64xf32, #tpu.memory_space<vmem>>, vector<192x64xf32>
    %cst_22 = arith.constant dense<0.000000e+00> : vector<1x64xf32>
    %25 = tpu.matmul %23, %24, %cst_22 {dimension_numbers = #tpu.dot_dimension_numbers<[1], [0], [0], [1], [0, 0, 1, 1], [], []>} : vector<1x192xf32>, vector<192x64xf32>, vector<1x64xf32> -> vector<1x64xf32>
    %26 = arith.addf %25, %4 : vector<1x64xf32>
    %cst_23 = arith.constant dense<0.000000e+00> : vector<1xf32>
    %27 = vector.multi_reduction <add>, %26, %cst_23 [1] : vector<1x64xf32> to vector<1xf32>
    %28 = vector.shape_cast %27 : vector<1xf32> to vector<1x1xf32>
    %cst_24 = arith.constant 6.400000e+01 : f32
    %29 = vector.broadcast %cst_24 : f32 to vector<1x1xf32>
    %30 = arith.divf %28, %29 : vector<1x1xf32>
    %31 = vector.broadcast %30 : vector<1x1xf32> to vector<1x64xf32>
    %32 = arith.subf %26, %31 : vector<1x64xf32>
    %33 = arith.mulf %32, %32 : vector<1x64xf32>
    %cst_25 = arith.constant dense<0.000000e+00> : vector<1xf32>
    %34 = vector.multi_reduction <add>, %33, %cst_25 [1] : vector<1x64xf32> to vector<1xf32>
    %35 = vector.shape_cast %34 : vector<1xf32> to vector<1x1xf32>
    %cst_26 = arith.constant 6.400000e+01 : f32
    %36 = vector.broadcast %cst_26 : f32 to vector<1x1xf32>
    %37 = arith.divf %35, %36 : vector<1x1xf32>
    %38 = vector.broadcast %30 : vector<1x1xf32> to vector<1x64xf32>
    %39 = arith.subf %26, %38 : vector<1x64xf32>
    %cst_27 = arith.constant 9.99999974E-6 : f32
    %40 = vector.broadcast %cst_27 : f32 to vector<1x1xf32>
    %41 = arith.addf %37, %40 : vector<1x1xf32>
    %42 = math.rsqrt %41 : vector<1x1xf32>
    %43 = vector.broadcast %42 : vector<1x1xf32> to vector<1x64xf32>
    %44 = arith.mulf %39, %43 : vector<1x64xf32>
    %45 = arith.mulf %44, %5 : vector<1x64xf32>
    %46 = arith.addf %45, %6 : vector<1x64xf32>
    %cst_28 = arith.constant dense<0.000000e+00> : vector<1xf32>
    %47 = vector.multi_reduction <add>, %46, %cst_28 [1] : vector<1x64xf32> to vector<1xf32>
    %48 = vector.shape_cast %47 : vector<1xf32> to vector<1x1xf32>
    %cst_29 = arith.constant 6.400000e+01 : f32
    %49 = vector.broadcast %cst_29 : f32 to vector<1x1xf32>
    %50 = arith.divf %48, %49 : vector<1x1xf32>
    %51 = arith.negf %50 : vector<1x1xf32>
    %52 = math.exp %51 : vector<1x1xf32>
    %cst_30 = arith.constant 1.000000e+00 : f32
    %53 = vector.broadcast %cst_30 : f32 to vector<1x1xf32>
    %54 = arith.addf %53, %52 : vector<1x1xf32>
    %55 = arith.divf %53, %54 : vector<1x1xf32>
    %56 = vector.shape_cast %55 : vector<1x1xf32> to vector<1x1xf32>
    %57 = vector.broadcast %56 : vector<1x1xf32> to vector<1x64xf32>
    %58 = tpu.concatenate %46, %57 in 1 : vector<1x64xf32>, vector<1x64xf32> -> vector<1x128xf32>
    %c0_31 = arith.constant 0 : index
    %c0_32 = arith.constant 0 : index
    %59 = vector.load %arg6[%c0_31, %c0_32] : memref<1x128xf32, #tpu.memory_space<vmem>>, vector<1x128xf32>
    tpu.vector_store %arg6[%c0_31, %c0_32], %58 {strides = array<i32>} : memref<1x128xf32, #tpu.memory_space<vmem>>, vector<1x128xf32>,
    return
  }
}

</mosaic_0001>

<llo_original>
// kernel: symbiotic_bcell_forward.1
$region0: #{symbiotic_bcell_forward.1}
  #allocation0 [shape = 'u32[]', space=smem, size = 0x4, offset = 0x4, fixed_abs, tag = 'smem constant byte address 0x4 - core index']
  #allocation1 [shape = 'u32[144,128]{1,0:T(1,128)}', space=vmem, size = 0x12000, scoped, tag = 'internal scratch']
  %s0 = inlined_call_operand.vmem [shape: f32[16,32], index: 0, kind: input, shape index: {}]
  %s1 = inlined_call_operand.vmem [shape: f32[16,16], index: 1, kind: input, shape index: {}]
  %s2 = inlined_call_operand.vmem [shape: f32[32,128], index: 2, kind: input, shape index: {}]
  %s3 = inlined_call_operand.vmem [shape: f32[128,192], index: 3, kind: input, shape index: {}]
  %s4 = inlined_call_operand.vmem [shape: f32[192,64], index: 4, kind: input, shape index: {}]
  %s5 = inlined_call_operand.vmem [shape: f32[1,512], index: 5, kind: input, shape index: {}]
  %s6 = inlined_call_operand.vmem [shape: f32[1,128], index: 6, kind: output, shape index: {}]
  %s7 = sld [smem:[#allocation0]]
  $region34: #{symbiotic_bcell_forward.1} parent=0
    _
  %s9 = ssub.s32 1, %s7
  %s10 = scalar_select 0, %s9, %s7
  // Predicated region
  $region2: #{symbiotic_bcell_forward.1} parent=0 // pred_check
    _
  $region3: #{symbiotic_bcell_forward.1} parent=0 // pred_check_branch
    %12 = sbr.rel (0) target = $region5
  $region4: #{symbiotic_bcell_forward.1} parent=0 // pred_region
    _
  $region5: #{symbiotic_bcell_forward.1} parent=0 // pred_fallthru
    _
  // Predicated region
  $region6: #{symbiotic_bcell_forward.1} parent=0 // pred_check
    _
  $region7: #{symbiotic_bcell_forward.1} parent=0 // pred_check_branch
    %14 = sbr.rel (0) target = $region9
  $region8: #{symbiotic_bcell_forward.1} parent=0 // pred_region
    _
  $region9: #{symbiotic_bcell_forward.1} parent=0 // pred_fallthru
    _
  // Predicated region
  $region10: #{symbiotic_bcell_forward.1} parent=0 // pred_check
    _
  $region11: #{symbiotic_bcell_forward.1} parent=0 // pred_check_branch
    %16 = sbr.rel (0) target = $region13
  $region12: #{symbiotic_bcell_forward.1} parent=0 // pred_region
    _
  $region13: #{symbiotic_bcell_forward.1} parent=0 // pred_fallthru
    _
  // Predicated region
  $region14: #{symbiotic_bcell_forward.1} parent=0 // pred_check
    _
  $region15: #{symbiotic_bcell_forward.1} parent=0 // pred_check_branch
    %18 = sbr.rel (0) target = $region17
  $region16: #{symbiotic_bcell_forward.1} parent=0 // pred_region
    _
  $region17: #{symbiotic_bcell_forward.1} parent=0 // pred_fallthru
    _
  // Predicated region
  $region18: #{symbiotic_bcell_forward.1} parent=0 // pred_check
    _
  $region19: #{symbiotic_bcell_forward.1} parent=0 // pred_check_branch
    %20 = sbr.rel (0) target = $region21
  $region20: #{symbiotic_bcell_forward.1} parent=0 // pred_region
    _
  $region21: #{symbiotic_bcell_forward.1} parent=0 // pred_fallthru
    _
  // Predicated region
  $region22: #{symbiotic_bcell_forward.1} parent=0 // pred_check
    _
  $region23: #{symbiotic_bcell_forward.1} parent=0 // pred_check_branch
    %22 = sbr.rel (0) target = $region25
  $region24: #{symbiotic_bcell_forward.1} parent=0 // pred_region
    _
  $region25: #{symbiotic_bcell_forward.1} parent=0 // pred_fallthru
    _
  %v23 = vld [vmem:[%s0] sm:$0xff]
  %v24 = vld [vmem:[%s0 + $0x8] sm:$0xff]
  %v25 = vld [vmem:[%s1] sm:$0xff]
  %v26 = vld [vmem:[%s1 + $0x8] sm:$0xff]
  %v27 = vld [vmem:[%s5] sm:$0x1]
  %v28 = vld [vmem:[%s5 + $0x1] sm:$0x3]
  %v29 = vld [vmem:[%s5 + $0x2] sm:$0x1]
  %v30 = vld [vmem:[%s5 + $0x3] sm:$0x1]
  %vm31 = vcmask 130048
  %v33 = vsel %vm31, %v25, 0
  %v36 = vsel %vm31, %v26, 0
  %38 = vmatprep.subr.mxu0 0.0
  %39 = vmatpush1.msra.mxu0 %v23
  %40 = vmatprep.subr.mxu0 0.0
  %41 = vmatpush1.msra.mxu0 %v24
  %42 = vmatprep.subr.mxu0 0.0
  %43 = vmatpush1.msra.mxu0 0.0
  %44 = vmatprep.subr.mxu0 0.0
  %45 = vmatpush1.msra.mxu0 0.0
  %46 = vmatprep.subr.mxu0 0.0
  %47 = vmatpush1.msra.mxu0 0.0
  %48 = vmatprep.subr.mxu0 0.0
  %49 = vmatpush1.msra.mxu0 0.0
  %50 = vmatprep.subr.mxu0 0.0
  %51 = vmatpush1.msra.mxu0 0.0
  %52 = vmatprep.subr.mxu0 0.0
  %53 = vmatpush1.msra.mxu0 0.0
  %54 = vmatprep.subr.mxu0 0.0
  %55 = vmatpush1.msra.mxu0 0.0
  %56 = vmatprep.subr.mxu0 0.0
  %57 = vmatpush1.msra.mxu0 0.0
  %58 = vmatprep.subr.mxu0 0.0
  %59 = vmatpush1.msra.mxu0 0.0
  %60 = vmatprep.subr.mxu0 0.0
  %61 = vmatpush1.msra.mxu0 0.0
  %62 = vmatprep.subr.mxu0 0.0
  %63 = vmatpush1.msra.mxu0 0.0
  %64 = vmatprep.subr.mxu0 0.0
  %65 = vmatpush1.msra.mxu0 0.0
  %66 = vmatprep.subr.mxu0 0.0
  %67 = vmatpush1.msra.mxu0 0.0
  %68 = vmatprep.subr.mxu0 0.0
  %69 = vmatpush1.msra.mxu0 0.0
  %70 = vmatprep.subr.mxu0 0.0
  %71 = vmatpush1.msra.mxu0 0.0
  %72 = vmatprep.subr.mxu0 0.0
  %73 = vmatpush1.msra.mxu0 0.0
  %74 = vmatprep.subr.mxu0 0.0
  %75 = vmatpush1.msra.mxu0 0.0
  %76 = vmatprep.subr.mxu0 0.0
  %77 = vmatpush1.msra.mxu0 0.0
  %78 = vmatprep.subr.mxu0 0.0
  %79 = vmatpush1.msra.mxu0 0.0
  %80 = vmatprep.subr.mxu0 0.0
  %81 = vmatpush1.msra.mxu0 0.0
  %82 = vmatprep.subr.mxu0 0.0
  %83 = vmatpush1.msra.mxu0 0.0
  %84 = vmatprep.subr.mxu0 0.0
  %85 = vmatpush1.msra.mxu0 0.0
  %86 = vmatprep.subr.mxu0 0.0
  %87 = vmatpush1.msra.mxu0 0.0
  %88 = vmatprep.subr.mxu0 0.0
  %89 = vmatpush1.msra.mxu0 0.0
  %90 = vmatprep.subr.mxu0 0.0
  %91 = vmatpush1.msra.mxu0 0.0
  %92 = vmatprep.subr.mxu0 0.0
  %93 = vmatpush1.msra.mxu0 0.0
  %94 = vmatprep.subr.mxu0 0.0
  %95 = vmatpush1.msra.mxu0 0.0
  %96 = vmatprep.subr.mxu0 0.0
  %97 = vmatpush1.msra.mxu0 0.0
  %98 = vmatprep.subr.mxu0 0.0
  %99 = vmatpush1.msra.mxu0 0.0
  %100 = vmatprep.subr.mxu0 0.0
  %101 = vmatpush1.msra.mxu0 0.0
  %102 = vmatprep.mubr.f32.mxu0 0.0
  %103 = vmatmul.mubr.f32.gmra.mrb[0].mxu0 %v33
  %v104 = vpop.f32.mrb[0].mxu0
  %v105 = vadd.f32 0.0, %v104
  %v106 = vpop.f32.mrb[0].mxu0
  %107 = vmatprep.mubr.f32.mxu0 0.0
  %108 = vmatmul.mubr.f32.gmra.mrb[0].mxu0 %v36
  %v109 = vpop.f32.mrb[0].mxu0
  %v110 = vadd.f32 0.0, %v109
  %v111 = vpop.f32.mrb[0].mxu0
  %112 = vdwg.mxu0
  %v113 = vld [vmem:[%s2] sm:$0xff]
  %v114 = vld [vmem:[%s2 + $0x8] sm:$0xff]
  %v115 = vld [vmem:[%s2 + $0x10] sm:$0xff]
  %v116 = vld [vmem:[%s2 + $0x18] sm:$0xff]
  %v118 = vlaneseq
  %v119 = vshrl.u32 %v118, 7
  %v120 = vsub.s32 0, %v119
  %v121 = vrot.slane %v27, %v120
  %vm123 = vcmask 261120
  %v125 = vsel %vm123, %v105, 0
  %v128 = vsel %vm123, %v110, 0
  %130 = vmatprep.subr.mxu0 0.0
  %131 = vmatpush1.msra.mxu0 %v113
  %132 = vmatprep.subr.mxu0 0.0
  %133 = vmatpush1.msra.mxu0 %v114
  %134 = vmatprep.subr.mxu0 0.0
  %135 = vmatpush1.msra.mxu0 %v115
  %136 = vmatprep.subr.mxu0 0.0
  %137 = vmatpush1.msra.mxu0 %v116
  %138 = vmatprep.subr.mxu0 0.0
  %139 = vmatpush1.msra.mxu0 0.0
  %140 = vmatprep.subr.mxu0 0.0
  %141 = vmatpush1.msra.mxu0 0.0
  %142 = vmatprep.subr.mxu0 0.0
  %143 = vmatpush1.msra.mxu0 0.0
  %144 = vmatprep.subr.mxu0 0.0
  %145 = vmatpush1.msra.mxu0 0.0
  %146 = vmatprep.subr.mxu0 0.0
  %147 = vmatpush1.msra.mxu0 0.0
  %148 = vmatprep.subr.mxu0 0.0
  %149 = vmatpush1.msra.mxu0 0.0
  %150 = vmatprep.subr.mxu0 0.0
  %151 = vmatpush1.msra.mxu0 0.0
  %152 = vmatprep.subr.mxu0 0.0
  %153 = vmatpush1.msra.mxu0 0.0
  %154 = vmatprep.subr.mxu0 0.0
  %155 = vmatpush1.msra.mxu0 0.0
  %156 = vmatprep.subr.mxu0 0.0
  %157 = vmatpush1.msra.mxu0 0.0
  %158 = vmatprep.subr.mxu0 0.0
  %159 = vmatpush1.msra.mxu0 0.0
  %160 = vmatprep.subr.mxu0 0.0
  %161 = vmatpush1.msra.mxu0 0.0
  %162 = vmatprep.subr.mxu0 0.0
  %163 = vmatpush1.msra.mxu0 0.0
  %164 = vmatprep.subr.mxu0 0.0
  %165 = vmatpush1.msra.mxu0 0.0
  %166 = vmatprep.subr.mxu0 0.0
  %167 = vmatpush1.msra.mxu0 0.0
  %168 = vmatprep.subr.mxu0 0.0
  %169 = vmatpush1.msra.mxu0 0.0
  %170 = vmatprep.subr.mxu0 0.0
  %171 = vmatpush1.msra.mxu0 0.0
  %172 = vmatprep.subr.mxu0 0.0
  %173 = vmatpush1.msra.mxu0 0.0
  %174 = vmatprep.subr.mxu0 0.0
  %175 = vmatpush1.msra.mxu0 0.0
  %176 = vmatprep.subr.mxu0 0.0
  %177 = vmatpush1.msra.mxu0 0.0
  %178 = vmatprep.subr.mxu0 0.0
  %179 = vmatpush1.msra.mxu0 0.0
  %180 = vmatprep.subr.mxu0 0.0
  %181 = vmatpush1.msra.mxu0 0.0
  %182 = vmatprep.subr.mxu0 0.0
  %183 = vmatpush1.msra.mxu0 0.0
  %184 = vmatprep.subr.mxu0 0.0
  %185 = vmatpush1.msra.mxu0 0.0
  %186 = vmatprep.subr.mxu0 0.0
  %187 = vmatpush1.msra.mxu0 0.0
  %188 = vmatprep.subr.mxu0 0.0
  %189 = vmatpush1.msra.mxu0 0.0
  %190 = vmatprep.subr.mxu0 0.0
  %191 = vmatpush1.msra.mxu0 0.0
  %192 = vmatprep.subr.mxu0 0.0
  %193 = vmatpush1.msra.mxu0 0.0
  %194 = vmatprep.mubr.f32.mxu0 0.0
  %195 = vmatmul.mubr.f32.gmra.mrb[0].mxu0 %v125
  %v196 = vpop.f32.mrb[0].mxu0
  %v197 = vadd.f32 %v121, %v196
  %v198 = vpop.f32.mrb[0].mxu0
  %199 = vmatprep.mubr.f32.mxu0 0.0
  %200 = vmatmul.mubr.f32.gmra.mrb[0].mxu0 %v128
  %v201 = vpop.f32.mrb[0].mxu0
  %v202 = vadd.f32 %v121, %v201
  %v203 = vpop.f32.mrb[0].mxu0
  %204 = vdwg.mxu0
  %v205 = vmax.f32 %v197, 0.0
  %v206 = vmax.f32 %v202, 0.0
  %v207 = vsel %vm31, %v25, 0.0
  %v208 = vsel %vm31, %v26, 0.0
  %v209 = vadd.f32 %v207, %v208
  %v210 = vrot.slane %v209, 4
  %v211 = vadd.f32 %v209, %v210
  %v212 = vrot.slane %v211, 2
  %v213 = vadd.f32 %v211, %v212
  %v214 = vrot.slane %v213, 1
  %v215 = vadd.f32 %v213, %v214
  %v216 = vrcp.pop 16.0
  %v217 = vmul.f32 %v215, %v216
  %v219 = vsel %vm31, %v217, 0
  %221 = vmatprep.subr.mxu0 0.0
  %222 = vmatpush1.msra.mxu0 %v205
  %223 = vmatprep.subr.mxu0 0.0
  %224 = vmatpush1.msra.mxu0 %v206
  %225 = vmatprep.subr.mxu0 0.0
  %226 = vmatpush1.msra.mxu0 0.0
  %227 = vmatprep.subr.mxu0 0.0
  %228 = vmatpush1.msra.mxu0 0.0
  %229 = vmatprep.subr.mxu0 0.0
  %230 = vmatpush1.msra.mxu0 0.0
  %231 = vmatprep.subr.mxu0 0.0
  %232 = vmatpush1.msra.mxu0 0.0
  %233 = vmatprep.subr.mxu0 0.0
  %234 = vmatpush1.msra.mxu0 0.0
  %235 = vmatprep.subr.mxu0 0.0
  %236 = vmatpush1.msra.mxu0 0.0
  %237 = vmatprep.subr.mxu0 0.0
  %238 = vmatpush1.msra.mxu0 0.0
  %239 = vmatprep.subr.mxu0 0.0
  %240 = vmatpush1.msra.mxu0 0.0
  %241 = vmatprep.subr.mxu0 0.0
  %242 = vmatpush1.msra.mxu0 0.0
  %243 = vmatprep.subr.mxu0 0.0
  %244 = vmatpush1.msra.mxu0 0.0
  %245 = vmatprep.subr.mxu0 0.0
  %246 = vmatpush1.msra.mxu0 0.0
  %247 = vmatprep.subr.mxu0 0.0
  %248 = vmatpush1.msra.mxu0 0.0
  %249 = vmatprep.subr.mxu0 0.0
  %250 = vmatpush1.msra.mxu0 0.0
  %251 = vmatprep.subr.mxu0 0.0
  %252 = vmatpush1.msra.mxu0 0.0
  %253 = vmatprep.subr.mxu0 0.0
  %254 = vmatpush1.msra.mxu0 0.0
  %255 = vmatprep.subr.mxu0 0.0
  %256 = vmatpush1.msra.mxu0 0.0
  %257 = vmatprep.subr.mxu0 0.0
  %258 = vmatpush1.msra.mxu0 0.0
  %259 = vmatprep.subr.mxu0 0.0
  %260 = vmatpush1.msra.mxu0 0.0
  %261 = vmatprep.subr.mxu0 0.0
  %262 = vmatpush1.msra.mxu0 0.0
  %263 = vmatprep.subr.mxu0 0.0
  %264 = vmatpush1.msra.mxu0 0.0
  %265 = vmatprep.subr.mxu0 0.0
  %266 = vmatpush1.msra.mxu0 0.0
  %267 = vmatprep.subr.mxu0 0.0
  %268 = vmatpush1.msra.mxu0 0.0
  %269 = vmatprep.subr.mxu0 0.0
  %270 = vmatpush1.msra.mxu0 0.0
  %271 = vmatprep.subr.mxu0 0.0
  %272 = vmatpush1.msra.mxu0 0.0
  %273 = vmatprep.subr.mxu0 0.0
  %274 = vmatpush1.msra.mxu0 0.0
  %275 = vmatprep.subr.mxu0 0.0
  %276 = vmatpush1.msra.mxu0 0.0
  %277 = vmatprep.subr.mxu0 0.0
  %278 = vmatpush1.msra.mxu0 0.0
  %279 = vmatprep.subr.mxu0 0.0
  %280 = vmatpush1.msra.mxu0 0.0
  %281 = vmatprep.subr.mxu0 0.0
  %282 = vmatpush1.msra.mxu0 0.0
  %283 = vmatprep.subr.mxu0 0.0
  %284 = vmatpush1.msra.mxu0 0.0
  %285 = vmatprep.mubr.f32.mxu0 0.0
  %286 = vmatmul.mubr.f32.gmra.mrb[0].mxu0 %v219
  %v287 = vpop.f32.mrb[0].mxu0
  %v288 = vadd.f32 0.0, %v287
  %v289 = vpop.f32.mrb[0].mxu0
  %290 = vdwg.mxu0
  %v291 = vld [vmem:[%s3] sm:$0xff]
  %v292 = vld [vmem:[%s3 + $0x8] sm:$0xff]
  %v293 = vld [vmem:[%s3 + $0x10] sm:$0xff]
  %v294 = vld [vmem:[%s3 + $0x18] sm:$0xff]
  %v295 = vld [vmem:[%s3 + $0x20] sm:$0xff]
  %v296 = vld [vmem:[%s3 + $0x28] sm:$0xff]
  %v297 = vld [vmem:[%s3 + $0x30] sm:$0xff]
  %v298 = vld [vmem:[%s3 + $0x38] sm:$0xff]
  %v299 = vld [vmem:[%s3 + $0x40] sm:$0xff]
  %v300 = vld [vmem:[%s3 + $0x48] sm:$0xff]
  %v301 = vld [vmem:[%s3 + $0x50] sm:$0xff]
  %v302 = vld [vmem:[%s3 + $0x58] sm:$0xff]
  %v303 = vld [vmem:[%s3 + $0x60] sm:$0xff]
  %v304 = vld [vmem:[%s3 + $0x68] sm:$0xff]
  %v305 = vld [vmem:[%s3 + $0x70] sm:$0xff]
  %v306 = vld [vmem:[%s3 + $0x78] sm:$0xff]
  %v307 = vld [vmem:[%s3 + $0x80] sm:$0xff]
  %v308 = vld [vmem:[%s3 + $0x88] sm:$0xff]
  %v309 = vld [vmem:[%s3 + $0x90] sm:$0xff]
  %v310 = vld [vmem:[%s3 + $0x98] sm:$0xff]
  %v311 = vld [vmem:[%s3 + $0xa0] sm:$0xff]
  %v312 = vld [vmem:[%s3 + $0xa8] sm:$0xff]
  %v313 = vld [vmem:[%s3 + $0xb0] sm:$0xff]
  %v314 = vld [vmem:[%s3 + $0xb8] sm:$0xff]
  %v315 = vld [vmem:[%s3 + $0xc0] sm:$0xff]
  %v316 = vld [vmem:[%s3 + $0xc8] sm:$0xff]
  %v317 = vld [vmem:[%s3 + $0xd0] sm:$0xff]
  %v318 = vld [vmem:[%s3 + $0xd8] sm:$0xff]
  %v319 = vld [vmem:[%s3 + $0xe0] sm:$0xff]
  %v320 = vld [vmem:[%s3 + $0xe8] sm:$0xff]
  %v321 = vld [vmem:[%s3 + $0xf0] sm:$0xff]
  %v322 = vld [vmem:[%s3 + $0xf8] sm:$0xff]
  %v324 = vlaneseq
  %v325 = vshrl.u32 %v324, 7
  %v326 = vsub.s32 0, %v325
  %v327 = vrot.slane %v28, %v326
  %v328 = vlaneseq
  %v329 = vshrl.u32 %v328, 7
  %v330 = vsub.s32 1, %v329
  %v331 = vrot.slane %v28, %v330
  %334 = vmatprep.subr.mxu0 %v292
  %335 = vmatpush1.msra.mxu0 %v291
  %336 = vmatprep.subr.mxu0 %v294
  %337 = vmatpush1.msra.mxu0 %v293
  %338 = vmatprep.subr.mxu0 %v296
  %339 = vmatpush1.msra.mxu0 %v295
  %340 = vmatprep.subr.mxu0 %v298
  %341 = vmatpush1.msra.mxu0 %v297
  %342 = vmatprep.subr.mxu0 %v300
  %343 = vmatpush1.msra.mxu0 %v299
  %344 = vmatprep.subr.mxu0 %v302
  %345 = vmatpush1.msra.mxu0 %v301
  %346 = vmatprep.subr.mxu0 %v304
  %347 = vmatpush1.msra.mxu0 %v303
  %348 = vmatprep.subr.mxu0 %v306
  %349 = vmatpush1.msra.mxu0 %v305
  %350 = vmatprep.subr.mxu0 %v308
  %351 = vmatpush1.msra.mxu0 %v307
  %352 = vmatprep.subr.mxu0 %v310
  %353 = vmatpush1.msra.mxu0 %v309
  %354 = vmatprep.subr.mxu0 %v312
  %355 = vmatpush1.msra.mxu0 %v311
  %356 = vmatprep.subr.mxu0 %v314
  %357 = vmatpush1.msra.mxu0 %v313
  %358 = vmatprep.subr.mxu0 %v316
  %359 = vmatpush1.msra.mxu0 %v315
  %360 = vmatprep.subr.mxu0 %v318
  %361 = vmatpush1.msra.mxu0 %v317
  %362 = vmatprep.subr.mxu0 %v320
  %363 = vmatpush1.msra.mxu0 %v319
  %364 = vmatprep.subr.mxu0 %v322
  %365 = vmatpush1.msra.mxu0 %v321
  %366 = vmatprep.subr.mxu0 0.0
  %367 = vmatpush1.msra.mxu0 0.0
  %368 = vmatprep.subr.mxu0 0.0
  %369 = vmatpush1.msra.mxu0 0.0
  %370 = vmatprep.subr.mxu0 0.0
  %371 = vmatpush1.msra.mxu0 0.0
  %372 = vmatprep.subr.mxu0 0.0
  %373 = vmatpush1.msra.mxu0 0.0
  %374 = vmatprep.subr.mxu0 0.0
  %375 = vmatpush1.msra.mxu0 0.0
  %376 = vmatprep.subr.mxu0 0.0
  %377 = vmatpush1.msra.mxu0 0.0
  %378 = vmatprep.subr.mxu0 0.0
  %379 = vmatpush1.msra.mxu0 0.0
  %380 = vmatprep.subr.mxu0 0.0
  %381 = vmatpush1.msra.mxu0 0.0
  %382 = vmatprep.subr.mxu0 0.0
  %383 = vmatpush1.msra.mxu0 0.0
  %384 = vmatprep.subr.mxu0 0.0
  %385 = vmatpush1.msra.mxu0 0.0
  %386 = vmatprep.subr.mxu0 0.0
  %387 = vmatpush1.msra.mxu0 0.0
  %388 = vmatprep.subr.mxu0 0.0
  %389 = vmatpush1.msra.mxu0 0.0
  %390 = vmatprep.subr.mxu0 0.0
  %391 = vmatpush1.msra.mxu0 0.0
  %392 = vmatprep.subr.mxu0 0.0
  %393 = vmatpush1.msra.mxu0 0.0
  %394 = vmatprep.subr.mxu0 0.0
  %395 = vmatpush1.msra.mxu0 0.0
  %396 = vmatprep.subr.mxu0 0.0
  %397 = vmatpush1.msra.mxu0 0.0
  %398 = vmatprep.mubr.f32.mxu0 0.0
  %399 = vmatmul.mubr.f32.gmra.mrb[0].mxu0 %v288
  %v400 = vpop.f32.mrb[0].mxu0
  %v401 = vadd.f32 %v327, %v400
  %v402 = vpop.f32.mrb[0].mxu0
  %v403 = vadd.f32 %v331, %v402
  %404 = vdwg.mxu0
  %v405 = vmax.f32 %v401, 0.0
  %v406 = vmax.f32 %v403, 0.0
  %v407 = vld [vmem:[%s4] sm:$0xff]
  %v408 = vld [vmem:[%s4 + $0x8] sm:$0xff]
  %v409 = vld [vmem:[%s4 + $0x10] sm:$0xff]
  %v410 = vld [vmem:[%s4 + $0x18] sm:$0xff]
  %v411 = vld [vmem:[%s4 + $0x20] sm:$0xff]
  %v412 = vld [vmem:[%s4 + $0x28] sm:$0xff]
  %v413 = vld [vmem:[%s4 + $0x30] sm:$0xff]
  %v414 = vld [vmem:[%s4 + $0x38] sm:$0xff]
  %v415 = vld [vmem:[%s4 + $0x40] sm:$0xff]
  %v416 = vld [vmem:[%s4 + $0x48] sm:$0xff]
  %v417 = vld [vmem:[%s4 + $0x50] sm:$0xff]
  %v418 = vld [vmem:[%s4 + $0x58] sm:$0xff]
  %v419 = vld [vmem:[%s4 + $0x60] sm:$0xff]
  %v420 = vld [vmem:[%s4 + $0x68] sm:$0xff]
  %v421 = vld [vmem:[%s4 + $0x70] sm:$0xff]
  %v422 = vld [vmem:[%s4 + $0x78] sm:$0xff]
  %v423 = vld [vmem:[%s4 + $0x80] sm:$0xff]
  %v424 = vld [vmem:[%s4 + $0x88] sm:$0xff]
  %v425 = vld [vmem:[%s4 + $0x90] sm:$0xff]
  %v426 = vld [vmem:[%s4 + $0x98] sm:$0xff]
  %v427 = vld [vmem:[%s4 + $0xa0] sm:$0xff]
  %v428 = vld [vmem:[%s4 + $0xa8] sm:$0xff]
  %v429 = vld [vmem:[%s4 + $0xb0] sm:$0xff]
  %v430 = vld [vmem:[%s4 + $0xb8] sm:$0xff]
  %v432 = vlaneseq
  %v433 = vshrl.u32 %v432, 7
  %v434 = vsub.s32 0, %v433
  %v435 = vrot.slane %v29, %v434
  %436 = vrot.lane.b32.xlu0 %v435, 64
  %v437 = vpop.permute.xlu0 %436
  %vm439 = vcmask 523264
  %v441 = vsel %vm439, %v406, 0
  %443 = vmatprep.subr.mxu0 0.0
  %444 = vmatpush1.msra.mxu0 %v407
  %445 = vmatprep.subr.mxu0 0.0
  %446 = vmatpush1.msra.mxu0 %v408
  %447 = vmatprep.subr.mxu0 0.0
  %448 = vmatpush1.msra.mxu0 %v409
  %449 = vmatprep.subr.mxu0 0.0
  %450 = vmatpush1.msra.mxu0 %v410
  %451 = vmatprep.subr.mxu0 0.0
  %452 = vmatpush1.msra.mxu0 %v411
  %453 = vmatprep.subr.mxu0 0.0
  %454 = vmatpush1.msra.mxu0 %v412
  %455 = vmatprep.subr.mxu0 0.0
  %456 = vmatpush1.msra.mxu0 %v413
  %457 = vmatprep.subr.mxu0 0.0
  %458 = vmatpush1.msra.mxu0 %v414
  %459 = vmatprep.subr.mxu0 0.0
  %460 = vmatpush1.msra.mxu0 %v415
  %461 = vmatprep.subr.mxu0 0.0
  %462 = vmatpush1.msra.mxu0 %v416
  %463 = vmatprep.subr.mxu0 0.0
  %464 = vmatpush1.msra.mxu0 %v417
  %465 = vmatprep.subr.mxu0 0.0
  %466 = vmatpush1.msra.mxu0 %v418
  %467 = vmatprep.subr.mxu0 0.0
  %468 = vmatpush1.msra.mxu0 %v419
  %469 = vmatprep.subr.mxu0 0.0
  %470 = vmatpush1.msra.mxu0 %v420
  %471 = vmatprep.subr.mxu0 0.0
  %472 = vmatpush1.msra.mxu0 %v421
  %473 = vmatprep.subr.mxu0 0.0
  %474 = vmatpush1.msra.mxu0 %v422
  %475 = vmatprep.subr.mxu0 0.0
  %476 = vmatpush1.msra.mxu0 %v423
  %477 = vmatprep.subr.mxu0 0.0
  %478 = vmatpush1.msra.mxu0 %v424
  %479 = vmatprep.subr.mxu0 0.0
  %480 = vmatpush1.msra.mxu0 %v425
  %481 = vmatprep.subr.mxu0 0.0
  %482 = vmatpush1.msra.mxu0 %v426
  %483 = vmatprep.subr.mxu0 0.0
  %484 = vmatpush1.msra.mxu0 %v427
  %485 = vmatprep.subr.mxu0 0.0
  %486 = vmatpush1.msra.mxu0 %v428
  %487 = vmatprep.subr.mxu0 0.0
  %488 = vmatpush1.msra.mxu0 %v429
  %489 = vmatprep.subr.mxu0 0.0
  %490 = vmatpush1.msra.mxu0 %v430
  %491 = vmatprep.subr.mxu0 0.0
  %492 = vmatpush1.msra.mxu0 0.0
  %493 = vmatprep.subr.mxu0 0.0
  %494 = vmatpush1.msra.mxu0 0.0
  %495 = vmatprep.subr.mxu0 0.0
  %496 = vmatpush1.msra.mxu0 0.0
  %497 = vmatprep.subr.mxu0 0.0
  %498 = vmatpush1.msra.mxu0 0.0
  %499 = vmatprep.subr.mxu0 0.0
  %500 = vmatpush1.msra.mxu0 0.0
  %501 = vmatprep.subr.mxu0 0.0
  %502 = vmatpush1.msra.mxu0 0.0
  %503 = vmatprep.subr.mxu0 0.0
  %504 = vmatpush1.msra.mxu0 0.0
  %505 = vmatprep.subr.mxu0 0.0
  %506 = vmatpush1.msra.mxu0 0.0
  %507 = vmatprep.mubr.f32.mxu0 %v441
  %508 = vmatmul.mubr.f32.gmra.mrb[0].mxu0 %v405
  %v509 = vpop.f32.mrb[0].mxu0
  %v510 = vadd.f32 %v437, %v509
  %v511 = vpop.f32.mrb[0].mxu0
  %512 = vdwg.mxu0
  %vm513 = vcmask 516096
  %v514 = vsel %vm513, %v510, 0.0
  %515 = vadd.xlane.f32.xlu0 %v514
  %v516 = vpop.xlane.xlu0 %515
  %v517 = vrcp.pop 64.0
  %v518 = vmul.f32 %v516, %v517
  %v519 = vsub.f32 %v510, %v518
  %v520 = vmul.f32 %v519, %v519
  %v521 = vsel %vm513, %v520, 0.0
  %522 = vadd.xlane.f32.xlu0 %v521
  %v523 = vpop.xlane.xlu0 %522
  %v524 = vmul.f32 %v523, %v517
  %v525 = vadd.f32 %v524, 1e-05
  %v526 = vrsqrt.pop %v525
  %v527 = vmul.f32 %v519, %v526
  %v528 = vmul.f32 %v527, %v30
  %v530 = vlaneseq
  %v531 = vshrl.u32 %v530, 7
  %v532 = vsub.s32 0, %v531
  %v533 = vrot.slane %v30, %v532
  %534 = vrot.lane.b32.xlu0 %v533, 64
  %v535 = vpop.permute.xlu0 %534
  %v537 = vadd.f32 %v528, %v535
  %v538 = vsel %vm513, %v537, 0.0
  %539 = vadd.xlane.f32.xlu0 %v538
  %v540 = vpop.xlane.xlu0 %539
  %v541 = vmul.f32 %v540, %v517
  %v542 = vxor.u32 %v541, 2147483648
  %v543 = vmul.f32 %v542, 1.442695
  %v544 = vpow.pop %v543
  %v545 = vadd.f32 %v544, 1.0
  %v546 = vrcp.pop %v545
  %v547 = vmul.f32 1.0, %v546
  %v548 = vsel %vm439, %v537, %v547
  %549 = vst [vmem:[%s6] sm:$0x1] %v548
  // Predicated region
  $region26: #{symbiotic_bcell_forward.1} parent=0 // pred_check
    _
  $region27: #{symbiotic_bcell_forward.1} parent=0 // pred_check_branch
    %551 = sbr.rel (0) target = $region29
  $region28: #{symbiotic_bcell_forward.1} parent=0 // pred_region
    _
  $region29: #{symbiotic_bcell_forward.1} parent=0 // pred_fallthru
    _
  // Predicated region
  $region30: #{symbiotic_bcell_forward.1} parent=0 // pred_check
    _
  $region31: #{symbiotic_bcell_forward.1} parent=0 // pred_check_branch
    %553 = sbr.rel (0) target = $region33
  $region32: #{symbiotic_bcell_forward.1} parent=0 // pred_region
    _
  $region33: #{symbiotic_bcell_forward.1} parent=0 // pred_fallthru
    _

</llo_original>
